<compile_context>
chip_gen: v7x
topology: tpu7x:2x2x1
jax: 0.10.0
libtpu: 0.0.40
codegen_flags: <defaults>
</compile_context>

<pallas_src>
import jax
import jax.numpy as jnp
from jax.experimental import pallas as pl
from jax.experimental.pallas import tpu as pltpu

IMAGE_SIZE = 256            # image_size (e.g. a 16x16 image, flattened)
H0, H1, OUT = 100, 50, 10   # logical layer widths (match the PyTorch module)

# lane-padded widths (multiples of 128 -> full 128-lane vregs / MXU columns)
H0_PAD, H1_PAD, OUT_PAD = 128, 128, 128

MAX_TILE_B = 1024           # ~3 MiB/step incl. double-buffering -> fits v5e's 16 MiB


def _round_up(n, m):
    return ((n + m - 1) // m) * m


def _choose_tile_b(batch, max_tile_b=MAX_TILE_B):
    """Largest sublane-aligned tile <= max_tile_b that still yields >=2 grid
    steps when the batch allows it (so v7x's two TensorCores both get work)."""
    b8 = _round_up(max(batch, 1), 8)
    target = max(8, min(max_tile_b, b8 // 2))
    return max(8, (target // 8) * 8)


def secondnet_kernel(x_ref, w0_ref, b0_ref, w1_ref, b1_ref, w2_ref, b2_ref, o_ref):
    x = x_ref[...]                                             # (tile_b, IMAGE_SIZE) bf16

    # fc0 -> bias + ReLU on the f32 accumulator.
    h0 = jnp.dot(x, w0_ref[...], preferred_element_type=jnp.float32)
    h0 = jnp.maximum(h0 + b0_ref[...], 0.0)
    # TODO(synk): training-mode dropout (p=0.1) omitted; eval-mode identity used.

    # fc1 -> bias + ReLU.
    h1 = jnp.dot(h0.astype(jnp.bfloat16), w1_ref[...],
                 preferred_element_type=jnp.float32)
    h1 = jnp.maximum(h1 + b1_ref[...], 0.0)

    # fc2.  Padded logit columns come out as exactly -1e30 because the padded
    # columns of w2 are zero and the padded entries of b2 are -1e30, so the
    # log_softmax below only "sees" the logical OUT classes (no in-kernel mask).
    logits = jnp.dot(h1.astype(jnp.bfloat16), w2_ref[...],
                     preferred_element_type=jnp.float32) + b2_ref[...]

    # Numerically stable log_softmax along dim=1 (f32; exp/log go to the EUP slot).
    m = jnp.max(logits, axis=-1, keepdims=True)
    shifted = logits - m
    lse = jnp.log(jnp.sum(jnp.exp(shifted), axis=-1, keepdims=True))
    o_ref[...] = (shifted - lse).astype(o_ref.dtype)           # bf16 writeback


def secondnet_forward(x, padded_params, *, max_tile_b=MAX_TILE_B):
    """x: any shape flattening to (-1, IMAGE_SIZE); returns (B, OUT) bf16 log-probs."""
    x = x.reshape(-1, IMAGE_SIZE)                 # mirrors x.view(-1, image_size)
    B = x.shape[0]
    tile_b = _choose_tile_b(B, max_tile_b)
    Bp = _round_up(B, tile_b)

    x_bf16 = x.astype(jnp.bfloat16)
    if Bp != B:
        # Pad only the trailing rows (no full zeros+update-slice round trip).
        x_bf16 = jnp.pad(x_bf16, ((0, Bp - B), (0, 0)))

    w0, b0, w1, b1, w2, b2 = (padded_params[k] for k in
                              ("w0", "b0", "w1", "b1", "w2", "b2"))

    def resident(shape):
        # Same block every grid step -> weights/biases stay VMEM-resident.
        return pl.BlockSpec(shape, lambda i: (0, 0))

    flops = 2 * Bp * (IMAGE_SIZE * H0_PAD + H0_PAD * H1_PAD + H1_PAD * OUT_PAD)
    transcendentals = Bp * (OUT_PAD + 1)
    bytes_accessed = int(
        x_bf16.size * 2 + Bp * OUT_PAD * 2 +
        sum(int(p.size) * p.dtype.itemsize for p in (w0, b0, w1, b1, w2, b2)))

    out = pl.pallas_call(
        secondnet_kernel,
        out_shape=jax.ShapeDtypeStruct((Bp, OUT_PAD), jnp.bfloat16),
        grid=(Bp // tile_b,),
        in_specs=[
            pl.BlockSpec((tile_b, IMAGE_SIZE), lambda i: (i, 0)),  # activations stream
            resident(w0.shape), resident(b0.shape),
            resident(w1.shape), resident(b1.shape),
            resident(w2.shape), resident(b2.shape),
        ],
        out_specs=pl.BlockSpec((tile_b, OUT_PAD), lambda i: (i, 0)),
        compiler_params=pltpu.CompilerParams(
            dimension_semantics=("parallel",)),       # v7x: shard tiles across 2 TCs
        cost_estimate=pl.CostEstimate(
            flops=flops, transcendentals=transcendentals,
            bytes_accessed=bytes_accessed),
    )(x_bf16, w0, b0, w1, b1, w2, b2)

    return out[:B, :OUT]


def init_params(key):
    """Logical-shape f32 params matching nn.Linear init (stored transposed: (in, out))."""
    ks = jax.random.split(key, 6)

    def linear(kw, kb, fan_in, fan_out):
        bound = 1.0 / jnp.sqrt(fan_in)
        w = jax.random.uniform(kw, (fan_in, fan_out), jnp.float32, -bound, bound)
        b = jax.random.uniform(kb, (fan_out,), jnp.float32, -bound, bound)
        return w, b

    w0, b0 = linear(ks[0], ks[1], IMAGE_SIZE, H0)
    w1, b1 = linear(ks[2], ks[3], H0, H1)
    w2, b2 = linear(ks[4], ks[5], H1, OUT)
    return {"w0": w0, "b0": b0, "w1": w1, "b1": b1, "w2": w2, "b2": b2}


def pad_params(params):
    """Zero-pad feature dims to lane multiples; weights -> bf16, biases -> f32 (1, F).
    b2's padded entries are -1e30 so padded logit columns never affect log_softmax."""
    def pad_w(w, rows, cols):
        out = jnp.zeros((rows, cols), jnp.float32).at[:w.shape[0], :w.shape[1]].set(w)
        return out.astype(jnp.bfloat16)

    def pad_b(b, cols, pad_value=0.0):
        return jnp.full((1, cols), pad_value, jnp.float32).at[0, :b.shape[0]].set(b)

    return {
        "w0": pad_w(params["w0"], IMAGE_SIZE, H0_PAD), "b0": pad_b(params["b0"], H0_PAD),
        "w1": pad_w(params["w1"], H0_PAD, H1_PAD),     "b1": pad_b(params["b1"], H1_PAD),
        "w2": pad_w(params["w2"], H1_PAD, OUT_PAD),
        "b2": pad_b(params["b2"], OUT_PAD, pad_value=-1e30),
    }


def reference_forward(x, params):
    """Pure-JAX f32 reference (eval-mode dropout = identity)."""
    x = x.reshape(-1, IMAGE_SIZE)
    h0 = jnp.maximum(x @ params["w0"] + params["b0"], 0.0)
    h1 = jnp.maximum(h0 @ params["w1"] + params["b1"], 0.0)
    logits = h1 @ params["w2"] + params["b2"]
    return jax.nn.log_softmax(logits, axis=1)


if __name__ == "__main__":
    key = jax.random.PRNGKey(0)
    k_params, k_x, k_x2 = jax.random.split(key, 3)

    params = init_params(k_params)
    padded = pad_params(params)

    fwd = jax.jit(lambda xs: secondnet_forward(xs, padded))

    # Small deterministic example: (8, 1, 16, 16) flattens to (8, 256),
    # mirroring x.view(-1, self.image_size).
    BATCH = 8
    x_img = jax.random.normal(k_x, (BATCH, 1, 16, 16), jnp.float32)

    out = jax.block_until_ready(fwd(x_img))
    assert out.shape == (BATCH, OUT)

    # sanity: log_softmax rows should sum (in prob space) to ~1 (bf16 output -> loose tol)
    row_sums = jnp.sum(jnp.exp(out.astype(jnp.float32)), axis=1)
    assert bool(jnp.all(jnp.abs(row_sums - 1.0) < 3e-2))

    # compare against a pure-JAX f32 reference (bf16 matmuls + bf16 output -> loose tol)
    ref = reference_forward(x_img, params)
    assert bool(jnp.max(jnp.abs(out.astype(jnp.float32) - ref)) < 1e-1)

    # ragged batch exercises the trailing-row pad + multi-step grid path
    BATCH2 = 20
    x_img2 = jax.random.normal(k_x2, (BATCH2, 1, 16, 16), jnp.float32)
    out2 = jax.block_until_ready(fwd(x_img2))
    assert out2.shape == (BATCH2, OUT)
    ref2 = reference_forward(x_img2, params)
    assert bool(jnp.max(jnp.abs(out2.astype(jnp.float32) - ref2)) < 1e-1)

    print("KERNEL_OK")
</pallas_src>

<mosaic_0001>
module attributes {stable_mosaic.version = 11 : i64} {
  func.func @secondnet_kernel(%arg0: i32, %arg1: memref<8x256xbf16, #tpu.memory_space<vmem>>, %arg2: memref<256x128xbf16, #tpu.memory_space<vmem>>, %arg3: memref<1x128xf32, #tpu.memory_space<vmem>>, %arg4: memref<128x128xbf16, #tpu.memory_space<vmem>>, %arg5: memref<1x128xf32, #tpu.memory_space<vmem>>, %arg6: memref<128x128xbf16, #tpu.memory_space<vmem>>, %arg7: memref<1x128xf32, #tpu.memory_space<vmem>>, %arg8: memref<8x128xbf16, #tpu.memory_space<vmem>>) attributes {dimension_semantics = [#tpu.dimension_semantics<parallel>], iteration_bounds = array<i64: 1>, scalar_prefetch = 0 : i64, scratch_operands = 0 : i64, tpu.core_type = #tpu.core_type<tc>, window_params = [{transform_indices = @transform_0, window_bounds = array<i64: 8, 256>}, {pipeline_mode = #tpu.pipeline_mode<synchronous>, transform_indices = @transform_1, window_bounds = array<i64: 256, 128>}, {pipeline_mode = #tpu.pipeline_mode<synchronous>, transform_indices = @transform_2, window_bounds = array<i64: 1, 128>}, {pipeline_mode = #tpu.pipeline_mode<synchronous>, transform_indices = @transform_3, window_bounds = array<i64: 128, 128>}, {pipeline_mode = #tpu.pipeline_mode<synchronous>, transform_indices = @transform_4, window_bounds = array<i64: 1, 128>}, {pipeline_mode = #tpu.pipeline_mode<synchronous>, transform_indices = @transform_5, window_bounds = array<i64: 128, 128>}, {pipeline_mode = #tpu.pipeline_mode<synchronous>, transform_indices = @transform_6, window_bounds = array<i64: 1, 128>}, {transform_indices = @transform_7, window_bounds = array<i64: 8, 128>}]} {
    %c0 = arith.constant 0 : index
    %c0_0 = arith.constant 0 : index
    %0 = vector.load %arg1[%c0, %c0_0] : memref<8x256xbf16, #tpu.memory_space<vmem>>, vector<8x256xbf16>
    %c0_1 = arith.constant 0 : index
    %c0_2 = arith.constant 0 : index
    %1 = vector.load %arg2[%c0_1, %c0_2] : memref<256x128xbf16, #tpu.memory_space<vmem>>, vector<256x128xbf16>
    %cst = arith.constant dense<0.000000e+00> : vector<8x128xf32>
    %2 = tpu.matmul %0, %1, %cst {dimension_numbers = #tpu.dot_dimension_numbers<[1], [0], [0], [1], [0, 0, 1, 1], [], []>} : vector<8x256xbf16>, vector<256x128xbf16>, vector<8x128xf32> -> vector<8x128xf32>
    %c0_3 = arith.constant 0 : index
    %c0_4 = arith.constant 0 : index
    %3 = vector.load %arg3[%c0_3, %c0_4] : memref<1x128xf32, #tpu.memory_space<vmem>>, vector<1x128xf32>
    %4 = vector.broadcast %3 : vector<1x128xf32> to vector<8x128xf32>
    %5 = arith.addf %2, %4 : vector<8x128xf32>
    %cst_5 = arith.constant 0.000000e+00 : f32
    %6 = vector.broadcast %cst_5 : f32 to vector<8x128xf32>
    %7 = arith.maximumf %5, %6 : vector<8x128xf32>
    %8 = arith.truncf %7 : vector<8x128xf32> to vector<8x128xbf16>
    %c0_6 = arith.constant 0 : index
    %c0_7 = arith.constant 0 : index
    %9 = vector.load %arg4[%c0_6, %c0_7] : memref<128x128xbf16, #tpu.memory_space<vmem>>, vector<128x128xbf16>
    %cst_8 = arith.constant dense<0.000000e+00> : vector<8x128xf32>
    %10 = tpu.matmul %8, %9, %cst_8 {dimension_numbers = #tpu.dot_dimension_numbers<[1], [0], [0], [1], [0, 0, 1, 1], [], []>} : vector<8x128xbf16>, vector<128x128xbf16>, vector<8x128xf32> -> vector<8x128xf32>
    %c0_9 = arith.constant 0 : index
    %c0_10 = arith.constant 0 : index
    %11 = vector.load %arg5[%c0_9, %c0_10] : memref<1x128xf32, #tpu.memory_space<vmem>>, vector<1x128xf32>
    %12 = vector.broadcast %11 : vector<1x128xf32> to vector<8x128xf32>
    %13 = arith.addf %10, %12 : vector<8x128xf32>
    %cst_11 = arith.constant 0.000000e+00 : f32
    %14 = vector.broadcast %cst_11 : f32 to vector<8x128xf32>
    %15 = arith.maximumf %13, %14 : vector<8x128xf32>
    %16 = arith.truncf %15 : vector<8x128xf32> to vector<8x128xbf16>
    %c0_12 = arith.constant 0 : index
    %c0_13 = arith.constant 0 : index
    %17 = vector.load %arg6[%c0_12, %c0_13] : memref<128x128xbf16, #tpu.memory_space<vmem>>, vector<128x128xbf16>
    %cst_14 = arith.constant dense<0.000000e+00> : vector<8x128xf32>
    %18 = tpu.matmul %16, %17, %cst_14 {dimension_numbers = #tpu.dot_dimension_numbers<[1], [0], [0], [1], [0, 0, 1, 1], [], []>} : vector<8x128xbf16>, vector<128x128xbf16>, vector<8x128xf32> -> vector<8x128xf32>
    %c0_15 = arith.constant 0 : index
    %c0_16 = arith.constant 0 : index
    %19 = vector.load %arg7[%c0_15, %c0_16] : memref<1x128xf32, #tpu.memory_space<vmem>>, vector<1x128xf32>
    %20 = vector.broadcast %19 : vector<1x128xf32> to vector<8x128xf32>
    %21 = arith.addf %18, %20 : vector<8x128xf32>
    %cst_17 = arith.constant dense<0xFF800000> : vector<8xf32>
    %22 = vector.multi_reduction <maximumf>, %21, %cst_17 [1] : vector<8x128xf32> to vector<8xf32>
    %23 = vector.shape_cast %22 : vector<8xf32> to vector<8x1xf32>
    %24 = vector.broadcast %23 : vector<8x1xf32> to vector<8x128xf32>
    %25 = arith.subf %21, %24 : vector<8x128xf32>
    %26 = math.exp %25 : vector<8x128xf32>
    %cst_18 = arith.constant dense<0.000000e+00> : vector<8xf32>
    %27 = vector.multi_reduction <add>, %26, %cst_18 [1] : vector<8x128xf32> to vector<8xf32>
    %28 = vector.shape_cast %27 : vector<8xf32> to vector<8x1xf32>
    %29 = math.log %28 : vector<8x1xf32>
    %30 = vector.broadcast %29 : vector<8x1xf32> to vector<8x128xf32>
    %31 = arith.subf %25, %30 : vector<8x128xf32>
    %32 = arith.truncf %31 : vector<8x128xf32> to vector<8x128xbf16>
    %c0_19 = arith.constant 0 : index
    %c0_20 = arith.constant 0 : index
    %33 = vector.load %arg8[%c0_19, %c0_20] : memref<8x128xbf16, #tpu.memory_space<vmem>>, vector<8x128xbf16>
    tpu.vector_store %arg8[%c0_19, %c0_20], %32 {strides = array<i32>} : memref<8x128xbf16, #tpu.memory_space<vmem>>, vector<8x128xbf16>,
    return
  }
  func.func @transform_0(%arg0: i32) -> (i32, i32) {
    %c0_i32 = arith.constant 0 : i32
    %c0_i32_0 = arith.constant 0 : i32
    return %arg0, %c0_i32 : i32, i32
  }
  func.func @transform_1(%arg0: i32) -> (i32, i32) {
    %c0_i32 = arith.constant 0 : i32
    %c0_i32_0 = arith.constant 0 : i32
    %c0_i32_1 = arith.constant 0 : i32
    return %c0_i32, %c0_i32_0 : i32, i32
  }
  func.func @transform_2(%arg0: i32) -> (i32, i32) {
    %c0_i32 = arith.constant 0 : i32
    %c0_i32_0 = arith.constant 0 : i32
    %c0_i32_1 = arith.constant 0 : i32
    return %c0_i32, %c0_i32_0 : i32, i32
  }
  func.func @transform_3(%arg0: i32) -> (i32, i32) {
    %c0_i32 = arith.constant 0 : i32
    %c0_i32_0 = arith.constant 0 : i32
    %c0_i32_1 = arith.constant 0 : i32
    return %c0_i32, %c0_i32_0 : i32, i32
  }
  func.func @transform_4(%arg0: i32) -> (i32, i32) {
    %c0_i32 = arith.constant 0 : i32
    %c0_i32_0 = arith.constant 0 : i32
    %c0_i32_1 = arith.constant 0 : i32
    return %c0_i32, %c0_i32_0 : i32, i32
  }
  func.func @transform_5(%arg0: i32) -> (i32, i32) {
    %c0_i32 = arith.constant 0 : i32
    %c0_i32_0 = arith.constant 0 : i32
    %c0_i32_1 = arith.constant 0 : i32
    return %c0_i32, %c0_i32_0 : i32, i32
  }
  func.func @transform_6(%arg0: i32) -> (i32, i32) {
    %c0_i32 = arith.constant 0 : i32
    %c0_i32_0 = arith.constant 0 : i32
    %c0_i32_1 = arith.constant 0 : i32
    return %c0_i32, %c0_i32_0 : i32, i32
  }
  func.func @transform_7(%arg0: i32) -> (i32, i32) {
    %c0_i32 = arith.constant 0 : i32
    %c0_i32_0 = arith.constant 0 : i32
    return %arg0, %c0_i32 : i32, i32
  }
}

</mosaic_0001>

<llo_original>
// kernel: _lambda_.1
$region0: #{_lambda_.1}
  #allocation0 [shape = 'u32[]', space=smem, size = 0x4, offset = 0x4, fixed_abs, tag = 'smem constant byte address 0x4 - core index']
  #allocation1 [shape = 'u32[144,128]{1,0:T(1,128)}', space=vmem, size = 0x12000, scoped, tag = 'internal scratch']
  %s0 = inlined_call_operand.vmem [shape: bf16[8,256], index: 0, kind: input, shape index: {}]
  %s1 = inlined_call_operand.vmem [shape: bf16[256,128], index: 1, kind: input, shape index: {}]
  %s2 = inlined_call_operand.vmem [shape: f32[1,128], index: 2, kind: input, shape index: {}]
  %s3 = inlined_call_operand.vmem [shape: bf16[128,128], index: 3, kind: input, shape index: {}]
  %s4 = inlined_call_operand.vmem [shape: f32[1,128], index: 4, kind: input, shape index: {}]
  %s5 = inlined_call_operand.vmem [shape: bf16[128,128], index: 5, kind: input, shape index: {}]
  %s6 = inlined_call_operand.vmem [shape: f32[1,128], index: 6, kind: input, shape index: {}]
  %s7 = inlined_call_operand.hbm [shape: bf16[8,128], index: 7, kind: output, shape index: {}]
  %s8 = sld [smem:[#allocation0]]
  $region38: #{_lambda_.1} parent=0
    _
  %s10 = ssub.s32 1, %s8
  %s11 = scalar_select 0, %s10, %s8
  $region1: #{_lambda_.1} parent=0
    #allocation2 [shape = 'u8[2048]{0}', space=vmem, size = 0x800, scoped, tag = 'output window, operand 0, single buffered']
    #allocation3 [shape = 's32[1]{0}', space=sflag, size = 0x4, scoped, tag = 'scoped memory for _lambda_.1']
    %12 = vsyncpa [#allocation3], 0
    // Predicated region
    $region2: #{_lambda_.1} parent=1 // pred_check
      _
    $region3: #{_lambda_.1} parent=1 // pred_check_branch
      %14 = sbr.rel (0) target = $region5
    $region4: #{_lambda_.1} parent=1 // pred_region
      _
    $region5: #{_lambda_.1} parent=1 // pred_fallthru
      _
    // Predicated region
    $region6: #{_lambda_.1} parent=1 // pred_check
      _
    $region7: #{_lambda_.1} parent=1 // pred_check_branch
      %16 = sbr.rel (0) target = $region9
    $region8: #{_lambda_.1} parent=1 // pred_region
      _
    $region9: #{_lambda_.1} parent=1 // pred_fallthru
      _
    // Predicated region
    $region10: #{_lambda_.1} parent=1 // pred_check
      _
    $region11: #{_lambda_.1} parent=1 // pred_check_branch
      %18 = sbr.rel (0) target = $region13
    $region12: #{_lambda_.1} parent=1 // pred_region
      _
    $region13: #{_lambda_.1} parent=1 // pred_fallthru
      _
    // Predicated region
    $region14: #{_lambda_.1} parent=1 // pred_check
      _
    $region15: #{_lambda_.1} parent=1 // pred_check_branch
      %20 = sbr.rel (0) target = $region17
    $region16: #{_lambda_.1} parent=1 // pred_region
      _
    $region17: #{_lambda_.1} parent=1 // pred_fallthru
      _
    // Predicated region
    $region18: #{_lambda_.1} parent=1 // pred_check
      _
    $region19: #{_lambda_.1} parent=1 // pred_check_branch
      %22 = sbr.rel (0) target = $region21
    $region20: #{_lambda_.1} parent=1 // pred_region
      _
    $region21: #{_lambda_.1} parent=1 // pred_fallthru
      _
    // Predicated region
    $region22: #{_lambda_.1} parent=1 // pred_check
      _
    $region23: #{_lambda_.1} parent=1 // pred_check_branch
      %24 = sbr.rel (0) target = $region25
    $region24: #{_lambda_.1} parent=1 // pred_region
      _
    $region25: #{_lambda_.1} parent=1 // pred_fallthru
      _
    // Predicated region
    $region26: #{_lambda_.1} parent=1 // pred_check
      _
    $region27: #{_lambda_.1} parent=1 // pred_check_branch
      %26 = sbr.rel (0) target = $region29
    $region28: #{_lambda_.1} parent=1 // pred_region
      _
    $region29: #{_lambda_.1} parent=1 // pred_fallthru
      _
    %v28 = vld [vmem:[%s0] sm:$0xff]
    %v29 = vld [vmem:[%s1] sm:$0xf]
    %v30 = vld [vmem:[%s1 + $0x4] sm:$0xf]
    %v31 = vld [vmem:[%s1 + $0x8] sm:$0xf]
    %v32 = vld [vmem:[%s1 + $0xc] sm:$0xf]
    %v33 = vld [vmem:[%s1 + $0x10] sm:$0xf]
    %v34 = vld [vmem:[%s1 + $0x14] sm:$0xf]
    %v35 = vld [vmem:[%s1 + $0x18] sm:$0xf]
    %v36 = vld [vmem:[%s1 + $0x1c] sm:$0xf]
    %v37 = vld [vmem:[%s1 + $0x20] sm:$0xf]
    %v38 = vld [vmem:[%s1 + $0x24] sm:$0xf]
    %v39 = vld [vmem:[%s1 + $0x28] sm:$0xf]
    %v40 = vld [vmem:[%s1 + $0x2c] sm:$0xf]
    %v41 = vld [vmem:[%s1 + $0x30] sm:$0xf]
    %v42 = vld [vmem:[%s1 + $0x34] sm:$0xf]
    %v43 = vld [vmem:[%s1 + $0x38] sm:$0xf]
    %v44 = vld [vmem:[%s1 + $0x3c] sm:$0xf]
    %v45 = vld [vmem:[%s1 + $0x40] sm:$0xf]
    %v46 = vld [vmem:[%s1 + $0x44] sm:$0xf]
    %v47 = vld [vmem:[%s1 + $0x48] sm:$0xf]
    %v48 = vld [vmem:[%s1 + $0x4c] sm:$0xf]
    %v49 = vld [vmem:[%s1 + $0x50] sm:$0xf]
    %v50 = vld [vmem:[%s1 + $0x54] sm:$0xf]
    %v51 = vld [vmem:[%s1 + $0x58] sm:$0xf]
    %v52 = vld [vmem:[%s1 + $0x5c] sm:$0xf]
    %v53 = vld [vmem:[%s1 + $0x60] sm:$0xf]
    %v54 = vld [vmem:[%s1 + $0x64] sm:$0xf]
    %v55 = vld [vmem:[%s1 + $0x68] sm:$0xf]
    %v56 = vld [vmem:[%s1 + $0x6c] sm:$0xf]
    %v57 = vld [vmem:[%s1 + $0x70] sm:$0xf]
    %v58 = vld [vmem:[%s1 + $0x74] sm:$0xf]
    %v59 = vld [vmem:[%s1 + $0x78] sm:$0xf]
    %v60 = vld [vmem:[%s1 + $0x7c] sm:$0xf]
    %v61 = vld [vmem:[%s2] sm:$0x1]
    %v63 = vlaneseq
    %v64 = vshrl.u32 %v63, 7
    %v65 = vsub.s32 0, %v64
    %v66 = vrot.slane %v61, %v65
    %v69 = vunpack.c.l.b16 %v28
    %v70 = vunpack.c.h.b16 %v28
    %v71 = vpack.c.b16 %v69, %v69
    %v72 = vpack.c.b16 %v70, %v70
    %v107 = vunpack.c.l.b16 %v29
    %v108 = vunpack.c.l.b16 %v30
    %v109 = vunpack.c.l.b16 %v31
    %v110 = vunpack.c.l.b16 %v32
    %v111 = vunpack.c.l.b16 %v33
    %v112 = vunpack.c.l.b16 %v34
    %v113 = vunpack.c.l.b16 %v35
    %v114 = vunpack.c.l.b16 %v36
    %v115 = vunpack.c.l.b16 %v37
    %v116 = vunpack.c.l.b16 %v38
    %v117 = vunpack.c.l.b16 %v39
    %v118 = vunpack.c.l.b16 %v40
    %v119 = vunpack.c.l.b16 %v41
    %v120 = vunpack.c.l.b16 %v42
    %v121 = vunpack.c.l.b16 %v43
    %v122 = vunpack.c.l.b16 %v44
    %v123 = vunpack.c.l.b16 %v45
    %v124 = vunpack.c.l.b16 %v46
    %v125 = vunpack.c.l.b16 %v47
    %v126 = vunpack.c.l.b16 %v48
    %v127 = vunpack.c.l.b16 %v49
    %v128 = vunpack.c.l.b16 %v50
    %v129 = vunpack.c.l.b16 %v51
    %v130 = vunpack.c.l.b16 %v52
    %v131 = vunpack.c.l.b16 %v53
    %v132 = vunpack.c.l.b16 %v54
    %v133 = vunpack.c.l.b16 %v55
    %v134 = vunpack.c.l.b16 %v56
    %v135 = vunpack.c.l.b16 %v57
    %v136 = vunpack.c.l.b16 %v58
    %v137 = vunpack.c.l.b16 %v59
    %v138 = vunpack.c.l.b16 %v60
    %v139 = vpack.c.b16 %v108, %v107
    %v140 = vpack.c.b16 %v110, %v109
    %v141 = vpack.c.b16 %v112, %v111
    %v142 = vpack.c.b16 %v114, %v113
    %v143 = vpack.c.b16 %v116, %v115
    %v144 = vpack.c.b16 %v118, %v117
    %v145 = vpack.c.b16 %v120, %v119
    %v146 = vpack.c.b16 %v122, %v121
    %v147 = vpack.c.b16 %v124, %v123
    %v148 = vpack.c.b16 %v126, %v125
    %v149 = vpack.c.b16 %v128, %v127
    %v150 = vpack.c.b16 %v130, %v129
    %v151 = vpack.c.b16 %v132, %v131
    %v152 = vpack.c.b16 %v134, %v133
    %v153 = vpack.c.b16 %v136, %v135
    %v154 = vpack.c.b16 %v138, %v137
    %171 = vmatprep.subr.bf16.mxu0 0
    %172 = vmatpush1.bf16.msra.mxu0 %v139
    %173 = vmatprep.subr.bf16.mxu0 0
    %174 = vmatpush1.bf16.msra.mxu0 %v140
    %175 = vmatprep.subr.bf16.mxu0 0
    %176 = vmatpush1.bf16.msra.mxu0 %v141
    %177 = vmatprep.subr.bf16.mxu0 0
    %178 = vmatpush1.bf16.msra.mxu0 %v142
    %179 = vmatprep.subr.bf16.mxu0 0
    %180 = vmatpush1.bf16.msra.mxu0 %v143
    %181 = vmatprep.subr.bf16.mxu0 0
    %182 = vmatpush1.bf16.msra.mxu0 %v144
    %183 = vmatprep.subr.bf16.mxu0 0
    %184 = vmatpush1.bf16.msra.mxu0 %v145
    %185 = vmatprep.subr.bf16.mxu0 0
    %186 = vmatpush1.bf16.msra.mxu0 %v146
    %187 = vmatprep.subr.bf16.mxu0 0
    %188 = vmatpush1.bf16.msra.mxu0 %v147
    %189 = vmatprep.subr.bf16.mxu0 0
    %190 = vmatpush1.bf16.msra.mxu0 %v148
    %191 = vmatprep.subr.bf16.mxu0 0
    %192 = vmatpush1.bf16.msra.mxu0 %v149
    %193 = vmatprep.subr.bf16.mxu0 0
    %194 = vmatpush1.bf16.msra.mxu0 %v150
    %195 = vmatprep.subr.bf16.mxu0 0
    %196 = vmatpush1.bf16.msra.mxu0 %v151
    %197 = vmatprep.subr.bf16.mxu0 0
    %198 = vmatpush1.bf16.msra.mxu0 %v152
    %199 = vmatprep.subr.bf16.mxu0 0
    %200 = vmatpush1.bf16.msra.mxu0 %v153
    %201 = vmatprep.subr.bf16.mxu0 0
    %202 = vmatpush1.bf16.msra.mxu0 %v154
    %203 = vmatprep.mubr.bf16.mxu0 %v72
    %204 = vmatmul.mubr.bf16.gmra.mrb[0].mxu0 %v71
    %v205 = vpop.f32.mrb[0].mxu0
    %v206 = vadd.f32 %v66, %v205
    %v207 = vpop.f32.mrb[0].mxu0
    %v208 = vpop.f32.mrb[0].mxu0
    %v209 = vpop.f32.mrb[0].mxu0
    %210 = vdwg.mxu0
    %v211 = vmax.f32 %v206, 0.0
    %v212 = vpack.c.bf16 %v211, %v211
    %v213 = vld [vmem:[%s3] sm:$0xf]
    %v214 = vld [vmem:[%s3 + $0x4] sm:$0xf]
    %v215 = vld [vmem:[%s3 + $0x8] sm:$0xf]
    %v216 = vld [vmem:[%s3 + $0xc] sm:$0xf]
    %v217 = vld [vmem:[%s3 + $0x10] sm:$0xf]
    %v218 = vld [vmem:[%s3 + $0x14] sm:$0xf]
    %v219 = vld [vmem:[%s3 + $0x18] sm:$0xf]
    %v220 = vld [vmem:[%s3 + $0x1c] sm:$0xf]
    %v221 = vld [vmem:[%s3 + $0x20] sm:$0xf]
    %v222 = vld [vmem:[%s3 + $0x24] sm:$0xf]
    %v223 = vld [vmem:[%s3 + $0x28] sm:$0xf]
    %v224 = vld [vmem:[%s3 + $0x2c] sm:$0xf]
    %v225 = vld [vmem:[%s3 + $0x30] sm:$0xf]
    %v226 = vld [vmem:[%s3 + $0x34] sm:$0xf]
    %v227 = vld [vmem:[%s3 + $0x38] sm:$0xf]
    %v228 = vld [vmem:[%s3 + $0x3c] sm:$0xf]
    %v229 = vld [vmem:[%s4] sm:$0x1]
    %v231 = vlaneseq
    %v232 = vshrl.u32 %v231, 7
    %v233 = vsub.s32 0, %v232
    %v234 = vrot.slane %v229, %v233
    %v252 = vunpack.c.l.b16 %v213
    %v253 = vunpack.c.l.b16 %v214
    %v254 = vunpack.c.l.b16 %v215
    %v255 = vunpack.c.l.b16 %v216
    %v256 = vunpack.c.l.b16 %v217
    %v257 = vunpack.c.l.b16 %v218
    %v258 = vunpack.c.l.b16 %v219
    %v259 = vunpack.c.l.b16 %v220
    %v260 = vunpack.c.l.b16 %v221
    %v261 = vunpack.c.l.b16 %v222
    %v262 = vunpack.c.l.b16 %v223
    %v263 = vunpack.c.l.b16 %v224
    %v264 = vunpack.c.l.b16 %v225
    %v265 = vunpack.c.l.b16 %v226
    %v266 = vunpack.c.l.b16 %v227
    %v267 = vunpack.c.l.b16 %v228
    %v268 = vpack.c.b16 %v253, %v252
    %v269 = vpack.c.b16 %v255, %v254
    %v270 = vpack.c.b16 %v257, %v256
    %v271 = vpack.c.b16 %v259, %v258
    %v272 = vpack.c.b16 %v261, %v260
    %v273 = vpack.c.b16 %v263, %v262
    %v274 = vpack.c.b16 %v265, %v264
    %v275 = vpack.c.b16 %v267, %v266
    %284 = vmatprep.subr.bf16.mxu0 0
    %285 = vmatpush1.bf16.msra.mxu0 %v268
    %286 = vmatprep.subr.bf16.mxu0 0
    %287 = vmatpush1.bf16.msra.mxu0 %v269
    %288 = vmatprep.subr.bf16.mxu0 0
    %289 = vmatpush1.bf16.msra.mxu0 %v270
    %290 = vmatprep.subr.bf16.mxu0 0
    %291 = vmatpush1.bf16.msra.mxu0 %v271
    %292 = vmatprep.subr.bf16.mxu0 0
    %293 = vmatpush1.bf16.msra.mxu0 %v272
    %294 = vmatprep.subr.bf16.mxu0 0
    %295 = vmatpush1.bf16.msra.mxu0 %v273
    %296 = vmatprep.subr.bf16.mxu0 0
    %297 = vmatpush1.bf16.msra.mxu0 %v274
    %298 = vmatprep.subr.bf16.mxu0 0
    %299 = vmatpush1.bf16.msra.mxu0 %v275
    %300 = vmatprep.subr.bf16.mxu0 0
    %301 = vmatpush1.bf16.msra.mxu0 0
    %302 = vmatprep.subr.bf16.mxu0 0
    %303 = vmatpush1.bf16.msra.mxu0 0
    %304 = vmatprep.subr.bf16.mxu0 0
    %305 = vmatpush1.bf16.msra.mxu0 0
    %306 = vmatprep.subr.bf16.mxu0 0
    %307 = vmatpush1.bf16.msra.mxu0 0
    %308 = vmatprep.subr.bf16.mxu0 0
    %309 = vmatpush1.bf16.msra.mxu0 0
    %310 = vmatprep.subr.bf16.mxu0 0
    %311 = vmatpush1.bf16.msra.mxu0 0
    %312 = vmatprep.subr.bf16.mxu0 0
    %313 = vmatpush1.bf16.msra.mxu0 0
    %314 = vmatprep.subr.bf16.mxu0 0
    %315 = vmatpush1.bf16.msra.mxu0 0
    %316 = vmatprep.mubr.bf16.mxu0 0
    %317 = vmatmul.mubr.bf16.gmra.mrb[0].mxu0 %v212
    %v318 = vpop.f32.mrb[0].mxu0
    %v319 = vadd.f32 %v234, %v318
    %v320 = vpop.f32.mrb[0].mxu0
    %v321 = vpop.f32.mrb[0].mxu0
    %v322 = vpop.f32.mrb[0].mxu0
    %323 = vdwg.mxu0
    %v324 = vmax.f32 %v319, 0.0
    %v325 = vpack.c.bf16 %v324, %v324
    %v326 = vld [vmem:[%s5] sm:$0xf]
    %v327 = vld [vmem:[%s5 + $0x4] sm:$0xf]
    %v328 = vld [vmem:[%s5 + $0x8] sm:$0xf]
    %v329 = vld [vmem:[%s5 + $0xc] sm:$0xf]
    %v330 = vld [vmem:[%s5 + $0x10] sm:$0xf]
    %v331 = vld [vmem:[%s5 + $0x14] sm:$0xf]
    %v332 = vld [vmem:[%s5 + $0x18] sm:$0xf]
    %v333 = vld [vmem:[%s5 + $0x1c] sm:$0xf]
    %v334 = vld [vmem:[%s5 + $0x20] sm:$0xf]
    %v335 = vld [vmem:[%s5 + $0x24] sm:$0xf]
    %v336 = vld [vmem:[%s5 + $0x28] sm:$0xf]
    %v337 = vld [vmem:[%s5 + $0x2c] sm:$0xf]
    %v338 = vld [vmem:[%s5 + $0x30] sm:$0xf]
    %v339 = vld [vmem:[%s5 + $0x34] sm:$0xf]
    %v340 = vld [vmem:[%s5 + $0x38] sm:$0xf]
    %v341 = vld [vmem:[%s5 + $0x3c] sm:$0xf]
    %v342 = vld [vmem:[%s6] sm:$0x1]
    %v344 = vlaneseq
    %v345 = vshrl.u32 %v344, 7
    %v346 = vsub.s32 0, %v345
    %v347 = vrot.slane %v342, %v346
    %v365 = vunpack.c.l.b16 %v326
    %v366 = vunpack.c.l.b16 %v327
    %v367 = vunpack.c.l.b16 %v328
    %v368 = vunpack.c.l.b16 %v329
    %v369 = vunpack.c.l.b16 %v330
    %v370 = vunpack.c.l.b16 %v331
    %v371 = vunpack.c.l.b16 %v332
    %v372 = vunpack.c.l.b16 %v333
    %v373 = vunpack.c.l.b16 %v334
    %v374 = vunpack.c.l.b16 %v335
    %v375 = vunpack.c.l.b16 %v336
    %v376 = vunpack.c.l.b16 %v337
    %v377 = vunpack.c.l.b16 %v338
    %v378 = vunpack.c.l.b16 %v339
    %v379 = vunpack.c.l.b16 %v340
    %v380 = vunpack.c.l.b16 %v341
    %v381 = vpack.c.b16 %v366, %v365
    %v382 = vpack.c.b16 %v368, %v367
    %v383 = vpack.c.b16 %v370, %v369
    %v384 = vpack.c.b16 %v372, %v371
    %v385 = vpack.c.b16 %v374, %v373
    %v386 = vpack.c.b16 %v376, %v375
    %v387 = vpack.c.b16 %v378, %v377
    %v388 = vpack.c.b16 %v380, %v379
    %397 = vmatprep.subr.bf16.mxu0 0
    %398 = vmatpush1.bf16.msra.mxu0 %v381
    %399 = vmatprep.subr.bf16.mxu0 0
    %400 = vmatpush1.bf16.msra.mxu0 %v382
    %401 = vmatprep.subr.bf16.mxu0 0
    %402 = vmatpush1.bf16.msra.mxu0 %v383
    %403 = vmatprep.subr.bf16.mxu0 0
    %404 = vmatpush1.bf16.msra.mxu0 %v384
    %405 = vmatprep.subr.bf16.mxu0 0
    %406 = vmatpush1.bf16.msra.mxu0 %v385
    %407 = vmatprep.subr.bf16.mxu0 0
    %408 = vmatpush1.bf16.msra.mxu0 %v386
    %409 = vmatprep.subr.bf16.mxu0 0
    %410 = vmatpush1.bf16.msra.mxu0 %v387
    %411 = vmatprep.subr.bf16.mxu0 0
    %412 = vmatpush1.bf16.msra.mxu0 %v388
    %413 = vmatprep.subr.bf16.mxu0 0
    %414 = vmatpush1.bf16.msra.mxu0 0
    %415 = vmatprep.subr.bf16.mxu0 0
    %416 = vmatpush1.bf16.msra.mxu0 0
    %417 = vmatprep.subr.bf16.mxu0 0
    %418 = vmatpush1.bf16.msra.mxu0 0
    %419 = vmatprep.subr.bf16.mxu0 0
    %420 = vmatpush1.bf16.msra.mxu0 0
    %421 = vmatprep.subr.bf16.mxu0 0
    %422 = vmatpush1.bf16.msra.mxu0 0
    %423 = vmatprep.subr.bf16.mxu0 0
    %424 = vmatpush1.bf16.msra.mxu0 0
    %425 = vmatprep.subr.bf16.mxu0 0
    %426 = vmatpush1.bf16.msra.mxu0 0
    %427 = vmatprep.subr.bf16.mxu0 0
    %428 = vmatpush1.bf16.msra.mxu0 0
    %429 = vmatprep.mubr.bf16.mxu0 0
    %430 = vmatmul.mubr.bf16.gmra.mrb[0].mxu0 %v325
    %v431 = vpop.f32.mrb[0].mxu0
    %v432 = vadd.f32 %v347, %v431
    %v433 = vpop.f32.mrb[0].mxu0
    %v434 = vpop.f32.mrb[0].mxu0
    %v435 = vpop.f32.mrb[0].mxu0
    %436 = vdwg.mxu0
    %437 = vmax.xlane.f32.xlu0 %v432
    %v438 = vpop.xlane.xlu0 %437
    %v439 = vsub.f32 %v432, %v438
    %v440 = vmul.f32 %v439, 1.442695
    %v441 = vpow.pop %v440
    %442 = vadd.xlane.f32.xlu0 %v441
    %v443 = vpop.xlane.xlu0 %442
    %v444 = vlog2.pop %v443
    %v445 = vmul.f32 %v444, 0.6931472
    %v446 = vsub.f32 %v439, %v445
    %v447 = vpack.c.bf16 %v446, %v446
    %448 = vst [vmem:[#allocation2] sm:$0xf] %v447
    // Predicated region
    $region30: #{_lambda_.1} parent=1 // pred_check
      _
    $region31: #{_lambda_.1} parent=1 // pred_check_branch
      %450 = sbr.rel (0) target = $region33
    $region32: #{_lambda_.1} parent=1 // pred_region
      %s452 = ssub.s32 64, 64
      %453 = vsyncadd [#allocation3], %s452
      %s455 = sshll.u32 [#allocation2], 4
      %s456 = int_to_ptr.vmem [resolvable:$true] %s455
      %458 = dma.vmem_to_hbm [thread:$0]  %s456, 64, %s7, [#allocation3]
    $region33: #{_lambda_.1} parent=1 // pred_fallthru
      _
    // Predicated region
    $region34: #{_lambda_.1} parent=1 // pred_check
      _
    $region35: #{_lambda_.1} parent=1 // pred_check_branch
      %460 = sbr.rel (0) target = $region37
    $region36: #{_lambda_.1} parent=1 // pred_region
      %461 = dma.done [#allocation3], 64
    $region37: #{_lambda_.1} parent=1 // pred_fallthru
      _
    %462 = vsyncpa [#allocation3], 1

</llo_original>
